<compile_context>
chip_gen: v7x
topology: tpu7x:2x2x1
jax: 0.10.0
libtpu: 0.0.40
codegen_flags: <defaults>
</compile_context>

<pallas_src>
import functools

import jax
import jax.numpy as jnp
import numpy as np
from jax.experimental import pallas as pl
from jax.experimental.pallas import tpu as pltpu

H = W = 8
HW = H * W
KS = 7
PAD = (KS - 1) // 2
NEG = -1.0e30
# SPP windows (top row, left col, kernel) in torch concat order:
#   size 1 -> Avg/MaxPool(8); size 2 -> k4 s4; size 3 (8%3 != 0) -> k4 s2.
_WINDOWS = ([(0, 0, 8)]
            + [(4 * i, 4 * j, 4) for i in range(2) for j in range(2)]
            + [(2 * i, 2 * j, 4) for i in range(3) for j in range(3)])
N_POOL = len(_WINDOWS)  # 14


def attention_kernel(x_ref, avgw_ref, maxb_ref, w1_ref, w2_ref, cbnb_ref,
                     spw_ref, sshift_ref, xid_ref, xnid_ref):
    """One batch element per grid step.

    x_ref     : (C, 64)       f32   one NCHW batch slab, lanes = h*8+w
    avgw_ref  : (64, 14)      bf16  per-window avg weights (1/count inside)
    maxb_ref  : (14, 64)      f32   additive max mask (0 inside, -1e30 outside)
    w1_ref    : (mid, 14*C)   bf16  1x1 conv #1, column index = p*C + c
    w2_ref    : (C, mid)      bf16  1x1 conv #2 with channel-BN scale folded in
    cbnb_ref  : (C, 1)        f32   channel-BN shift
    spw_ref   : (128, 64)     bf16  folded 7x7 conv [max; mean] with BN scale
    sshift_ref: (1, 64)       f32   spatial-BN shift (broadcast over lanes)
    """
    x = x_ref[...]                                               # (C, 64) f32
    xb = x.astype(jnp.bfloat16)

    # ---- SPP avg pooling: one MXU matmul, contraction depth 64 ------------
    ci_avg = jnp.dot(xb, avgw_ref[...],
                     preferred_element_type=jnp.float32)         # (C, 14)

    # ---- SPP max pooling + stack the (14*C, 1) channel-branch column ------
    cols = []
    for p in range(N_POOL):
        mx_p = jnp.max(x + maxb_ref[p:p + 1, :], axis=1, keepdims=True)  # (C,1)
        cols.append(ci_avg[:, p:p + 1] + mx_p)                           # avg+max
    ci_col = jnp.concatenate(cols, axis=0).astype(jnp.bfloat16)  # (14*C, 1)

    # ---- channel branch: deep matmul -> ReLU -> matmul -> BN -> sigmoid ---
    h = jnp.maximum(
        jnp.dot(w1_ref[...], ci_col, preferred_element_type=jnp.float32),
        0.0)                                                     # (mid, 1)
    cs_lin = jnp.dot(w2_ref[...], h.astype(jnp.bfloat16),
                     preferred_element_type=jnp.float32)         # (C, 1)
    cs = jax.nn.sigmoid(cs_lin + cbnb_ref[...])                  # (C, 1)

    # ---- spatial branch: [max_c | mean_c] -> folded 7x7 conv (one matmul) --
    inv_c = 1.0 / x.shape[0]
    mx = jnp.max(x, axis=0, keepdims=True)                       # (1, 64)
    mn = jnp.sum(x, axis=0, keepdims=True) * inv_c               # (1, 64)
    sp_in = jnp.concatenate([mx, mn], axis=1).astype(jnp.bfloat16)  # (1, 128)
    ss_lin = jnp.dot(sp_in, spw_ref[...],
                     preferred_element_type=jnp.float32)         # (1, 64)
    ss = jax.nn.sigmoid(ss_lin + sshift_ref[...])                # (1, 64)

    # ---- combine: (C,1) and (1,64) scales broadcast directly ---------------
    x_non_id = (0.5 * x) * (cs + ss)                             # (C, 64)
    xnid_ref[...] = x_non_id
    xid_ref[...] = x - x_non_id


@jax.jit
def attention_module(x, kp):
    N, C, h, w = x.shape
    assert (h, w) == (H, W), "this module's SPP assumes an 8x8 feature map"
    x3 = x.reshape(N, C, HW)                                     # free view

    const2 = lambda n: (0, 0)
    in_specs = [
        pl.BlockSpec((None, C, HW), lambda n: (n, 0, 0)),        # x, per batch
        pl.BlockSpec(kp["avgw_t"].shape, const2),
        pl.BlockSpec(kp["maxb"].shape, const2),
        pl.BlockSpec(kp["w1"].shape, const2),
        pl.BlockSpec(kp["w2s"].shape, const2),
        pl.BlockSpec(kp["cbnb"].shape, const2),
        pl.BlockSpec(kp["spw"].shape, const2),
        pl.BlockSpec(kp["sshift"].shape, const2),
    ]
    out_specs = (pl.BlockSpec((None, C, HW), lambda n: (n, 0, 0)),
                 pl.BlockSpec((None, C, HW), lambda n: (n, 0, 0)))
    out_shape = (jax.ShapeDtypeStruct((N, C, HW), jnp.float32),
                 jax.ShapeDtypeStruct((N, C, HW), jnp.float32))

    # Real VMEM footprint: x block + 2 output blocks (double-buffered) plus the
    # resident weights, with slack for intermediates / compiler scratch.
    def _nbytes(a):
        return int(np.prod(a.shape)) * a.dtype.itemsize
    block_bytes = C * HW * 4
    weight_bytes = sum(_nbytes(kp[k]) for k in
                       ("avgw_t", "maxb", "w1", "w2s", "cbnb", "spw", "sshift"))
    vmem_bytes = int(min(48 * 1024 * 1024,
                         max(16 * 1024 * 1024,
                             3 * 2 * block_bytes + 2 * weight_bytes
                             + 4 * 1024 * 1024)))

    xid3, xnid3 = pl.pallas_call(
        attention_kernel,
        grid=(N,),
        in_specs=in_specs,
        out_specs=out_specs,
        out_shape=out_shape,
        compiler_params=pltpu.CompilerParams(
            dimension_semantics=("parallel",),
            vmem_limit_bytes=vmem_bytes),
    )(x3, kp["avgw_t"], kp["maxb"], kp["w1"], kp["w2s"], kp["cbnb"],
      kp["spw"], kp["sshift"])
    return xid3.reshape(N, C, H, W), xnid3.reshape(N, C, H, W)


def init_params(key, channels, reduction=16):
    """Torch-layout parameters of the module (conv weights + BN stats)."""
    cc = channels * N_POOL
    mid = cc // reduction
    ks = jax.random.split(key, 7)
    w1 = jax.random.normal(ks[0], (mid, cc), jnp.float32) / np.sqrt(cc)
    w2 = jax.random.normal(ks[1], (channels, mid), jnp.float32) / np.sqrt(mid)
    conv_w = jax.random.normal(ks[2], (2, KS, KS), jnp.float32) / np.sqrt(2.0 * KS * KS)
    c_gamma = 1.0 + 0.1 * jax.random.normal(ks[3], (channels,), jnp.float32)
    c_beta = 0.1 * jax.random.normal(ks[4], (channels,), jnp.float32)
    c_mean = 0.1 * jax.random.normal(ks[5], (channels,), jnp.float32)
    c_var = 1.0 + 0.1 * jax.random.uniform(ks[6], (channels,), jnp.float32)
    return dict(w1=w1, w2=w2, conv_w=conv_w,
                c_gamma=c_gamma, c_beta=c_beta, c_mean=c_mean, c_var=c_var,
                s_gamma=jnp.float32(1.1), s_beta=jnp.float32(0.05),
                s_mean=jnp.float32(0.02), s_var=jnp.float32(0.9))


def pack_params(params, eps=1e-5):
    """Fold/reorder torch-layout weights into kernel-ready arrays (host, once)."""
    C = int(params["c_gamma"].shape[0])
    mid = int(params["w1"].shape[0])

    # Per-window avg weights and additive max masks over lanes q = h*8 + w.
    avg_w = np.zeros((N_POOL, HW), np.float32)
    max_b = np.full((N_POOL, HW), NEG, np.float32)
    for p, (r0, c0, k) in enumerate(_WINDOWS):
        m = np.zeros((H, W), np.float32)
        m[r0:r0 + k, c0:c0 + k] = 1.0
        mf = m.reshape(HW)
        avg_w[p] = mf / float(k * k)
        max_b[p] = np.where(mf > 0, 0.0, NEG).astype(np.float32)

    # 1x1 conv #1: (mid, 14C) torch concat order -> (mid, 14*C), col = p*C + c.
    c_idx = np.arange(C)[:, None]
    p_idx = np.arange(N_POOL)[None, :]
    tidx = np.where(p_idx == 0, c_idx,
                    np.where(p_idx < 5,
                             C + c_idx * 4 + (p_idx - 1),
                             5 * C + c_idx * 9 + (p_idx - 5)))            # (C, 14)
    w1_np = np.asarray(params["w1"])
    w1_pc = np.transpose(w1_np[:, tidx], (0, 2, 1)).reshape(mid, N_POOL * C)

    # Channel BN folded: scale into w2, shift kept as additive (C, 1) column.
    c_scale = np.asarray(params["c_gamma"]) / np.sqrt(np.asarray(params["c_var"]) + eps)
    c_shift = np.asarray(params["c_beta"]) - np.asarray(params["c_mean"]) * c_scale
    w2s = np.asarray(params["w2"]) * c_scale[:, None]                     # (C, mid)

    # 7x7 'same' conv folded into dense matrices:
    #   sp_m[ch, yi*8+xi, yo*8+xo] = conv_w[ch, yi-yo+3, xi-xo+3] (0 outside).
    yi = np.arange(H)[:, None, None, None]
    xi = np.arange(W)[None, :, None, None]
    yo = np.arange(H)[None, None, :, None]
    xo = np.arange(W)[None, None, None, :]
    ky = yi - yo + PAD
    kx = xi - xo + PAD
    valid = ((ky >= 0) & (ky < KS) & (kx >= 0) & (kx < KS)).astype(np.float32)
    kyc = np.clip(ky, 0, KS - 1)
    kxc = np.clip(kx, 0, KS - 1)
    conv_w = np.asarray(params["conv_w"])
    sp_m = (conv_w[:, kyc, kxc] * valid[None]).reshape(2, HW, HW)

    # Spatial BN folded: scale into the conv matrix, shift as a (1, 64) row.
    s_scale = float(params["s_gamma"]) / float(np.sqrt(float(params["s_var"]) + eps))
    s_shift = float(params["s_beta"]) - float(params["s_mean"]) * s_scale
    spw = np.concatenate([sp_m[0], sp_m[1]], axis=0) * s_scale            # (128, 64)

    return dict(
        avgw_t=jnp.asarray(avg_w.T, jnp.bfloat16),                        # (64, 14)
        maxb=jnp.asarray(max_b, jnp.float32),                             # (14, 64)
        w1=jnp.asarray(w1_pc, jnp.bfloat16),                              # (mid, 14C)
        w2s=jnp.asarray(w2s, jnp.bfloat16),                               # (C, mid)
        cbnb=jnp.asarray(c_shift.reshape(C, 1), jnp.float32),             # (C, 1)
        spw=jnp.asarray(spw, jnp.bfloat16),                               # (128, 64)
        sshift=jnp.full((1, HW), s_shift, jnp.float32),                   # (1, 64)
    )


def attention_reference(x, params, eps=1e-5):
    """Plain-JAX reference of the torch module (inference-mode BN)."""
    N, C = x.shape[0], x.shape[1]
    xf = x.reshape(N, C, HW)

    def spp(op):
        outs = [op(xf, axis=2)]
        s2 = [op(x[:, :, 4 * i:4 * i + 4, 4 * j:4 * j + 4].reshape(N, C, 16), axis=2)
              for i in range(2) for j in range(2)]
        outs.append(jnp.stack(s2, axis=2).reshape(N, 4 * C))
        s3 = [op(x[:, :, 2 * i:2 * i + 4, 2 * j:2 * j + 4].reshape(N, C, 16), axis=2)
              for i in range(3) for j in range(3)]
        outs.append(jnp.stack(s3, axis=2).reshape(N, 9 * C))
        return jnp.concatenate(outs, axis=1)                              # (N, 14C)

    ci = spp(jnp.mean) + spp(jnp.max)
    h = jnp.maximum(ci @ params["w1"].T, 0.0)
    cs_lin = h @ params["w2"].T
    c_scale = params["c_gamma"] / jnp.sqrt(params["c_var"] + eps)
    c_shift = params["c_beta"] - params["c_mean"] * c_scale
    cs = jax.nn.sigmoid(cs_lin * c_scale + c_shift)                       # (N, C)

    sp_in = jnp.stack([jnp.max(x, axis=1), jnp.mean(x, axis=1)], axis=1)  # (N, 2, 8, 8)
    conv = jax.lax.conv_general_dilated(
        sp_in, params["conv_w"][None], window_strides=(1, 1),
        padding=((PAD, PAD), (PAD, PAD)),
        dimension_numbers=("NCHW", "OIHW", "NCHW"))[:, 0]                 # (N, 8, 8)
    s_scale = params["s_gamma"] / jnp.sqrt(params["s_var"] + eps)
    s_shift = params["s_beta"] - params["s_mean"] * s_scale
    ss = jax.nn.sigmoid(conv * s_scale + s_shift)                         # (N, 8, 8)

    x_non_id = 0.5 * (x * cs[:, :, None, None] + x * ss[:, None, :, :])
    x_id = x - x_non_id
    return x_id, x_non_id


if __name__ == "__main__":
    key = jax.random.PRNGKey(0)
    kx, kparam = jax.random.split(key)
    N, C = 2, 8                       # small test shapes; 14*C divisible by 16
    x = jax.random.normal(kx, (N, C, H, W), jnp.float32)
    params = init_params(kparam, channels=C, reduction=16)
    kp = pack_params(params)

    x_id, x_non_id = attention_module(x, kp)
    jax.block_until_ready((x_id, x_non_id))
    assert x_id.shape == (N, C, H, W) and x_non_id.shape == (N, C, H, W)

    # Numerical check against a plain-JAX reference of the torch forward pass
    # (tolerance accounts for bf16 MXU operands with f32 accumulation).
    ref_id, ref_non_id = attention_reference(x, params)
    np.testing.assert_allclose(np.asarray(x_id), np.asarray(ref_id),
                               rtol=3e-2, atol=3e-2)
    np.testing.assert_allclose(np.asarray(x_non_id), np.asarray(ref_non_id),
                               rtol=3e-2, atol=3e-2)
    print("KERNEL_OK")
</pallas_src>

<mosaic_0001>
module attributes {stable_mosaic.version = 11 : i64} {
  func.func @attention_kernel(%arg0: i32, %arg1: memref<1x8x64xf32, #tpu.memory_space<vmem>>, %arg2: memref<64x14xbf16, #tpu.memory_space<vmem>>, %arg3: memref<14x64xf32, #tpu.memory_space<vmem>>, %arg4: memref<7x112xbf16, #tpu.memory_space<vmem>>, %arg5: memref<8x7xbf16, #tpu.memory_space<vmem>>, %arg6: memref<8x1xf32, #tpu.memory_space<vmem>>, %arg7: memref<128x64xbf16, #tpu.memory_space<vmem>>, %arg8: memref<1x64xf32, #tpu.memory_space<vmem>>, %arg9: memref<1x8x64xf32, #tpu.memory_space<vmem>>, %arg10: memref<1x8x64xf32, #tpu.memory_space<vmem>>) attributes {dimension_semantics = [#tpu.dimension_semantics<parallel>], iteration_bounds = array<i64: 2>, scalar_prefetch = 0 : i64, scratch_operands = 0 : i64, tpu.core_type = #tpu.core_type<tc>, window_params = [{transform_indices = @transform_0, window_bounds = array<i64: 1, 8, 64>}, {pipeline_mode = #tpu.pipeline_mode<synchronous>, transform_indices = @transform_1, window_bounds = array<i64: 64, 14>}, {pipeline_mode = #tpu.pipeline_mode<synchronous>, transform_indices = @transform_2, window_bounds = array<i64: 14, 64>}, {pipeline_mode = #tpu.pipeline_mode<synchronous>, transform_indices = @transform_3, window_bounds = array<i64: 7, 112>}, {pipeline_mode = #tpu.pipeline_mode<synchronous>, transform_indices = @transform_4, window_bounds = array<i64: 8, 7>}, {pipeline_mode = #tpu.pipeline_mode<synchronous>, transform_indices = @transform_5, window_bounds = array<i64: 8, 1>}, {pipeline_mode = #tpu.pipeline_mode<synchronous>, transform_indices = @transform_6, window_bounds = array<i64: 128, 64>}, {pipeline_mode = #tpu.pipeline_mode<synchronous>, transform_indices = @transform_7, window_bounds = array<i64: 1, 64>}, {transform_indices = @transform_8, window_bounds = array<i64: 1, 8, 64>}, {transform_indices = @transform_9, window_bounds = array<i64: 1, 8, 64>}]} {
    %c0 = arith.constant 0 : index
    %c0_0 = arith.constant 0 : index
    %c0_1 = arith.constant 0 : index
    %0 = vector.load %arg1[%c0, %c0_0, %c0_1] : memref<1x8x64xf32, #tpu.memory_space<vmem>>, vector<1x8x64xf32>
    %1 = vector.shape_cast %0 : vector<1x8x64xf32> to vector<8x64xf32>
    %2 = arith.truncf %1 : vector<8x64xf32> to vector<8x64xbf16>
    %c0_2 = arith.constant 0 : index
    %c0_3 = arith.constant 0 : index
    %3 = vector.load %arg2[%c0_2, %c0_3] : memref<64x14xbf16, #tpu.memory_space<vmem>>, vector<64x14xbf16>
    %cst = arith.constant dense<0.000000e+00> : vector<8x14xf32>
    %4 = tpu.matmul %2, %3, %cst {dimension_numbers = #tpu.dot_dimension_numbers<[1], [0], [0], [1], [0, 0, 1, 1], [], []>} : vector<8x64xbf16>, vector<64x14xbf16>, vector<8x14xf32> -> vector<8x14xf32>
    %c0_4 = arith.constant 0 : index
    %c0_5 = arith.constant 0 : index
    %5 = vector.load %arg3[%c0_4, %c0_5] : memref<14x64xf32, #tpu.memory_space<vmem>>, vector<1x64xf32>
    %6 = vector.broadcast %5 : vector<1x64xf32> to vector<8x64xf32>
    %7 = arith.addf %1, %6 : vector<8x64xf32>
    %cst_6 = arith.constant dense<0xFF800000> : vector<8xf32>
    %8 = vector.multi_reduction <maximumf>, %7, %cst_6 [1] : vector<8x64xf32> to vector<8xf32>
    %9 = vector.shape_cast %8 : vector<8xf32> to vector<8x1xf32>
    %10 = vector.extract_strided_slice %4 {offsets = [0, 0], sizes = [8, 1], strides = [1, 1]} : vector<8x14xf32> to vector<8x1xf32>
    %11 = arith.addf %10, %9 : vector<8x1xf32>
    %c1 = arith.constant 1 : index
    %c0_7 = arith.constant 0 : index
    %12 = vector.load %arg3[%c1, %c0_7] : memref<14x64xf32, #tpu.memory_space<vmem>>, vector<1x64xf32>
    %13 = vector.broadcast %12 : vector<1x64xf32> to vector<8x64xf32>
    %14 = arith.addf %1, %13 : vector<8x64xf32>
    %cst_8 = arith.constant dense<0xFF800000> : vector<8xf32>
    %15 = vector.multi_reduction <maximumf>, %14, %cst_8 [1] : vector<8x64xf32> to vector<8xf32>
    %16 = vector.shape_cast %15 : vector<8xf32> to vector<8x1xf32>
    %17 = vector.extract_strided_slice %4 {offsets = [0, 1], sizes = [8, 1], strides = [1, 1]} : vector<8x14xf32> to vector<8x1xf32>
    %18 = arith.addf %17, %16 : vector<8x1xf32>
    %c2 = arith.constant 2 : index
    %c0_9 = arith.constant 0 : index
    %19 = vector.load %arg3[%c2, %c0_9] : memref<14x64xf32, #tpu.memory_space<vmem>>, vector<1x64xf32>
    %20 = vector.broadcast %19 : vector<1x64xf32> to vector<8x64xf32>
    %21 = arith.addf %1, %20 : vector<8x64xf32>
    %cst_10 = arith.constant dense<0xFF800000> : vector<8xf32>
    %22 = vector.multi_reduction <maximumf>, %21, %cst_10 [1] : vector<8x64xf32> to vector<8xf32>
    %23 = vector.shape_cast %22 : vector<8xf32> to vector<8x1xf32>
    %24 = vector.extract_strided_slice %4 {offsets = [0, 2], sizes = [8, 1], strides = [1, 1]} : vector<8x14xf32> to vector<8x1xf32>
    %25 = arith.addf %24, %23 : vector<8x1xf32>
    %c3 = arith.constant 3 : index
    %c0_11 = arith.constant 0 : index
    %26 = vector.load %arg3[%c3, %c0_11] : memref<14x64xf32, #tpu.memory_space<vmem>>, vector<1x64xf32>
    %27 = vector.broadcast %26 : vector<1x64xf32> to vector<8x64xf32>
    %28 = arith.addf %1, %27 : vector<8x64xf32>
    %cst_12 = arith.constant dense<0xFF800000> : vector<8xf32>
    %29 = vector.multi_reduction <maximumf>, %28, %cst_12 [1] : vector<8x64xf32> to vector<8xf32>
    %30 = vector.shape_cast %29 : vector<8xf32> to vector<8x1xf32>
    %31 = vector.extract_strided_slice %4 {offsets = [0, 3], sizes = [8, 1], strides = [1, 1]} : vector<8x14xf32> to vector<8x1xf32>
    %32 = arith.addf %31, %30 : vector<8x1xf32>
    %c4 = arith.constant 4 : index
    %c0_13 = arith.constant 0 : index
    %33 = vector.load %arg3[%c4, %c0_13] : memref<14x64xf32, #tpu.memory_space<vmem>>, vector<1x64xf32>
    %34 = vector.broadcast %33 : vector<1x64xf32> to vector<8x64xf32>
    %35 = arith.addf %1, %34 : vector<8x64xf32>
    %cst_14 = arith.constant dense<0xFF800000> : vector<8xf32>
    %36 = vector.multi_reduction <maximumf>, %35, %cst_14 [1] : vector<8x64xf32> to vector<8xf32>
    %37 = vector.shape_cast %36 : vector<8xf32> to vector<8x1xf32>
    %38 = vector.extract_strided_slice %4 {offsets = [0, 4], sizes = [8, 1], strides = [1, 1]} : vector<8x14xf32> to vector<8x1xf32>
    %39 = arith.addf %38, %37 : vector<8x1xf32>
    %c5 = arith.constant 5 : index
    %c0_15 = arith.constant 0 : index
    %40 = vector.load %arg3[%c5, %c0_15] : memref<14x64xf32, #tpu.memory_space<vmem>>, vector<1x64xf32>
    %41 = vector.broadcast %40 : vector<1x64xf32> to vector<8x64xf32>
    %42 = arith.addf %1, %41 : vector<8x64xf32>
    %cst_16 = arith.constant dense<0xFF800000> : vector<8xf32>
    %43 = vector.multi_reduction <maximumf>, %42, %cst_16 [1] : vector<8x64xf32> to vector<8xf32>
    %44 = vector.shape_cast %43 : vector<8xf32> to vector<8x1xf32>
    %45 = vector.extract_strided_slice %4 {offsets = [0, 5], sizes = [8, 1], strides = [1, 1]} : vector<8x14xf32> to vector<8x1xf32>
    %46 = arith.addf %45, %44 : vector<8x1xf32>
    %c6 = arith.constant 6 : index
    %c0_17 = arith.constant 0 : index
    %47 = vector.load %arg3[%c6, %c0_17] : memref<14x64xf32, #tpu.memory_space<vmem>>, vector<1x64xf32>
    %48 = vector.broadcast %47 : vector<1x64xf32> to vector<8x64xf32>
    %49 = arith.addf %1, %48 : vector<8x64xf32>
    %cst_18 = arith.constant dense<0xFF800000> : vector<8xf32>
    %50 = vector.multi_reduction <maximumf>, %49, %cst_18 [1] : vector<8x64xf32> to vector<8xf32>
    %51 = vector.shape_cast %50 : vector<8xf32> to vector<8x1xf32>
    %52 = vector.extract_strided_slice %4 {offsets = [0, 6], sizes = [8, 1], strides = [1, 1]} : vector<8x14xf32> to vector<8x1xf32>
    %53 = arith.addf %52, %51 : vector<8x1xf32>
    %c7 = arith.constant 7 : index
    %c0_19 = arith.constant 0 : index
    %54 = vector.load %arg3[%c7, %c0_19] : memref<14x64xf32, #tpu.memory_space<vmem>>, vector<1x64xf32>
    %55 = vector.broadcast %54 : vector<1x64xf32> to vector<8x64xf32>
    %56 = arith.addf %1, %55 : vector<8x64xf32>
    %cst_20 = arith.constant dense<0xFF800000> : vector<8xf32>
    %57 = vector.multi_reduction <maximumf>, %56, %cst_20 [1] : vector<8x64xf32> to vector<8xf32>
    %58 = vector.shape_cast %57 : vector<8xf32> to vector<8x1xf32>
    %59 = vector.extract_strided_slice %4 {offsets = [0, 7], sizes = [8, 1], strides = [1, 1]} : vector<8x14xf32> to vector<8x1xf32>
    %60 = arith.addf %59, %58 : vector<8x1xf32>
    %c8 = arith.constant 8 : index
    %c0_21 = arith.constant 0 : index
    %61 = vector.load %arg3[%c8, %c0_21] : memref<14x64xf32, #tpu.memory_space<vmem>>, vector<1x64xf32>
    %62 = vector.broadcast %61 : vector<1x64xf32> to vector<8x64xf32>
    %63 = arith.addf %1, %62 : vector<8x64xf32>
    %cst_22 = arith.constant dense<0xFF800000> : vector<8xf32>
    %64 = vector.multi_reduction <maximumf>, %63, %cst_22 [1] : vector<8x64xf32> to vector<8xf32>
    %65 = vector.shape_cast %64 : vector<8xf32> to vector<8x1xf32>
    %66 = vector.extract_strided_slice %4 {offsets = [0, 8], sizes = [8, 1], strides = [1, 1]} : vector<8x14xf32> to vector<8x1xf32>
    %67 = arith.addf %66, %65 : vector<8x1xf32>
    %c9 = arith.constant 9 : index
    %c0_23 = arith.constant 0 : index
    %68 = vector.load %arg3[%c9, %c0_23] : memref<14x64xf32, #tpu.memory_space<vmem>>, vector<1x64xf32>
    %69 = vector.broadcast %68 : vector<1x64xf32> to vector<8x64xf32>
    %70 = arith.addf %1, %69 : vector<8x64xf32>
    %cst_24 = arith.constant dense<0xFF800000> : vector<8xf32>
    %71 = vector.multi_reduction <maximumf>, %70, %cst_24 [1] : vector<8x64xf32> to vector<8xf32>
    %72 = vector.shape_cast %71 : vector<8xf32> to vector<8x1xf32>
    %73 = vector.extract_strided_slice %4 {offsets = [0, 9], sizes = [8, 1], strides = [1, 1]} : vector<8x14xf32> to vector<8x1xf32>
    %74 = arith.addf %73, %72 : vector<8x1xf32>
    %c10 = arith.constant 10 : index
    %c0_25 = arith.constant 0 : index
    %75 = vector.load %arg3[%c10, %c0_25] : memref<14x64xf32, #tpu.memory_space<vmem>>, vector<1x64xf32>
    %76 = vector.broadcast %75 : vector<1x64xf32> to vector<8x64xf32>
    %77 = arith.addf %1, %76 : vector<8x64xf32>
    %cst_26 = arith.constant dense<0xFF800000> : vector<8xf32>
    %78 = vector.multi_reduction <maximumf>, %77, %cst_26 [1] : vector<8x64xf32> to vector<8xf32>
    %79 = vector.shape_cast %78 : vector<8xf32> to vector<8x1xf32>
    %80 = vector.extract_strided_slice %4 {offsets = [0, 10], sizes = [8, 1], strides = [1, 1]} : vector<8x14xf32> to vector<8x1xf32>
    %81 = arith.addf %80, %79 : vector<8x1xf32>
    %c11 = arith.constant 11 : index
    %c0_27 = arith.constant 0 : index
    %82 = vector.load %arg3[%c11, %c0_27] : memref<14x64xf32, #tpu.memory_space<vmem>>, vector<1x64xf32>
    %83 = vector.broadcast %82 : vector<1x64xf32> to vector<8x64xf32>
    %84 = arith.addf %1, %83 : vector<8x64xf32>
    %cst_28 = arith.constant dense<0xFF800000> : vector<8xf32>
    %85 = vector.multi_reduction <maximumf>, %84, %cst_28 [1] : vector<8x64xf32> to vector<8xf32>
    %86 = vector.shape_cast %85 : vector<8xf32> to vector<8x1xf32>
    %87 = vector.extract_strided_slice %4 {offsets = [0, 11], sizes = [8, 1], strides = [1, 1]} : vector<8x14xf32> to vector<8x1xf32>
    %88 = arith.addf %87, %86 : vector<8x1xf32>
    %c12 = arith.constant 12 : index
    %c0_29 = arith.constant 0 : index
    %89 = vector.load %arg3[%c12, %c0_29] : memref<14x64xf32, #tpu.memory_space<vmem>>, vector<1x64xf32>
    %90 = vector.broadcast %89 : vector<1x64xf32> to vector<8x64xf32>
    %91 = arith.addf %1, %90 : vector<8x64xf32>
    %cst_30 = arith.constant dense<0xFF800000> : vector<8xf32>
    %92 = vector.multi_reduction <maximumf>, %91, %cst_30 [1] : vector<8x64xf32> to vector<8xf32>
    %93 = vector.shape_cast %92 : vector<8xf32> to vector<8x1xf32>
    %94 = vector.extract_strided_slice %4 {offsets = [0, 12], sizes = [8, 1], strides = [1, 1]} : vector<8x14xf32> to vector<8x1xf32>
    %95 = arith.addf %94, %93 : vector<8x1xf32>
    %c13 = arith.constant 13 : index
    %c0_31 = arith.constant 0 : index
    %96 = vector.load %arg3[%c13, %c0_31] : memref<14x64xf32, #tpu.memory_space<vmem>>, vector<1x64xf32>
    %97 = vector.broadcast %96 : vector<1x64xf32> to vector<8x64xf32>
    %98 = arith.addf %1, %97 : vector<8x64xf32>
    %cst_32 = arith.constant dense<0xFF800000> : vector<8xf32>
    %99 = vector.multi_reduction <maximumf>, %98, %cst_32 [1] : vector<8x64xf32> to vector<8xf32>
    %100 = vector.shape_cast %99 : vector<8xf32> to vector<8x1xf32>
    %101 = vector.extract_strided_slice %4 {offsets = [0, 13], sizes = [8, 1], strides = [1, 1]} : vector<8x14xf32> to vector<8x1xf32>
    %102 = arith.addf %101, %100 : vector<8x1xf32>
    %103 = tpu.concatenate %11, %18, %25, %32, %39, %46, %53, %60, %67, %74, %81, %88, %95, %102 in 0 : vector<8x1xf32>, vector<8x1xf32>, vector<8x1xf32>, vector<8x1xf32>, vector<8x1xf32>, vector<8x1xf32>, vector<8x1xf32>, vector<8x1xf32>, vector<8x1xf32>, vector<8x1xf32>, vector<8x1xf32>, vector<8x1xf32>, vector<8x1xf32>, vector<8x1xf32> -> vector<112x1xf32>
    %104 = arith.truncf %103 : vector<112x1xf32> to vector<112x1xbf16>
    %c0_33 = arith.constant 0 : index
    %c0_34 = arith.constant 0 : index
    %105 = vector.load %arg4[%c0_33, %c0_34] : memref<7x112xbf16, #tpu.memory_space<vmem>>, vector<7x112xbf16>
    %cst_35 = arith.constant dense<0.000000e+00> : vector<7x1xf32>
    %106 = tpu.matmul %105, %104, %cst_35 {dimension_numbers = #tpu.dot_dimension_numbers<[1], [0], [0], [1], [0, 0, 1, 1], [], []>} : vector<7x112xbf16>, vector<112x1xbf16>, vector<7x1xf32> -> vector<7x1xf32>
    %cst_36 = arith.constant 0.000000e+00 : f32
    %107 = vector.broadcast %cst_36 : f32 to vector<7x1xf32>
    %108 = arith.maximumf %106, %107 : vector<7x1xf32>
    %c0_37 = arith.constant 0 : index
    %c0_38 = arith.constant 0 : index
    %109 = vector.load %arg5[%c0_37, %c0_38] : memref<8x7xbf16, #tpu.memory_space<vmem>>, vector<8x7xbf16>
    %110 = arith.truncf %108 : vector<7x1xf32> to vector<7x1xbf16>
    %cst_39 = arith.constant dense<0.000000e+00> : vector<8x1xf32>
    %111 = tpu.matmul %109, %110, %cst_39 {dimension_numbers = #tpu.dot_dimension_numbers<[1], [0], [0], [1], [0, 0, 1, 1], [], []>} : vector<8x7xbf16>, vector<7x1xbf16>, vector<8x1xf32> -> vector<8x1xf32>
    %c0_40 = arith.constant 0 : index
    %c0_41 = arith.constant 0 : index
    %112 = vector.load %arg6[%c0_40, %c0_41] : memref<8x1xf32, #tpu.memory_space<vmem>>, vector<8x1xf32>
    %113 = arith.addf %111, %112 : vector<8x1xf32>
    %114 = arith.negf %113 : vector<8x1xf32>
    %115 = math.exp %114 : vector<8x1xf32>
    %cst_42 = arith.constant 1.000000e+00 : f32
    %116 = vector.broadcast %cst_42 : f32 to vector<8x1xf32>
    %117 = arith.addf %116, %115 : vector<8x1xf32>
    %118 = arith.divf %116, %117 : vector<8x1xf32>
    %cst_43 = arith.constant dense<0xFF800000> : vector<64xf32>
    %119 = vector.multi_reduction <maximumf>, %1, %cst_43 [0] : vector<8x64xf32> to vector<64xf32>
    %120 = vector.shape_cast %119 : vector<64xf32> to vector<1x64xf32>
    %cst_44 = arith.constant dense<0.000000e+00> : vector<64xf32>
    %121 = vector.multi_reduction <add>, %1, %cst_44 [0] : vector<8x64xf32> to vector<64xf32>
    %122 = vector.shape_cast %121 : vector<64xf32> to vector<1x64xf32>
    %cst_45 = arith.constant 1.250000e-01 : f32
    %123 = vector.broadcast %cst_45 : f32 to vector<1x64xf32>
    %124 = arith.mulf %122, %123 : vector<1x64xf32>
    %125 = tpu.concatenate %120, %124 in 1 : vector<1x64xf32>, vector<1x64xf32> -> vector<1x128xf32>
    %126 = arith.truncf %125 : vector<1x128xf32> to vector<1x128xbf16>
    %c0_46 = arith.constant 0 : index
    %c0_47 = arith.constant 0 : index
    %127 = vector.load %arg7[%c0_46, %c0_47] : memref<128x64xbf16, #tpu.memory_space<vmem>>, vector<128x64xbf16>
    %cst_48 = arith.constant dense<0.000000e+00> : vector<1x64xf32>
    %128 = tpu.matmul %126, %127, %cst_48 {dimension_numbers = #tpu.dot_dimension_numbers<[1], [0], [0], [1], [0, 0, 1, 1], [], []>} : vector<1x128xbf16>, vector<128x64xbf16>, vector<1x64xf32> -> vector<1x64xf32>
    %c0_49 = arith.constant 0 : index
    %c0_50 = arith.constant 0 : index
    %129 = vector.load %arg8[%c0_49, %c0_50] : memref<1x64xf32, #tpu.memory_space<vmem>>, vector<1x64xf32>
    %130 = arith.addf %128, %129 : vector<1x64xf32>
    %131 = arith.negf %130 : vector<1x64xf32>
    %132 = math.exp %131 : vector<1x64xf32>
    %cst_51 = arith.constant 1.000000e+00 : f32
    %133 = vector.broadcast %cst_51 : f32 to vector<1x64xf32>
    %134 = arith.addf %133, %132 : vector<1x64xf32>
    %135 = arith.divf %133, %134 : vector<1x64xf32>
    %cst_52 = arith.constant 5.000000e-01 : f32
    %136 = vector.broadcast %cst_52 : f32 to vector<8x64xf32>
    %137 = arith.mulf %136, %1 : vector<8x64xf32>
    %138 = vector.broadcast %118 : vector<8x1xf32> to vector<8x64xf32>
    %139 = vector.broadcast %135 : vector<1x64xf32> to vector<8x64xf32>
    %140 = arith.addf %138, %139 : vector<8x64xf32>
    %141 = arith.mulf %137, %140 : vector<8x64xf32>
    %c0_53 = arith.constant 0 : index
    %c0_54 = arith.constant 0 : index
    %c0_55 = arith.constant 0 : index
    %142 = vector.load %arg10[%c0_53, %c0_54, %c0_55] : memref<1x8x64xf32, #tpu.memory_space<vmem>>, vector<1x8x64xf32>
    %143 = vector.shape_cast %142 : vector<1x8x64xf32> to vector<8x64xf32>
    %144 = vector.shape_cast %141 : vector<8x64xf32> to vector<1x8x64xf32>
    tpu.vector_store %arg10[%c0_53, %c0_54, %c0_55], %144 {strides = array<i32>} : memref<1x8x64xf32, #tpu.memory_space<vmem>>, vector<1x8x64xf32>,
    %145 = arith.subf %1, %141 : vector<8x64xf32>
    %c0_56 = arith.constant 0 : index
    %c0_57 = arith.constant 0 : index
    %c0_58 = arith.constant 0 : index
    %146 = vector.load %arg9[%c0_56, %c0_57, %c0_58] : memref<1x8x64xf32, #tpu.memory_space<vmem>>, vector<1x8x64xf32>
    %147 = vector.shape_cast %146 : vector<1x8x64xf32> to vector<8x64xf32>
    %148 = vector.shape_cast %145 : vector<8x64xf32> to vector<1x8x64xf32>
    tpu.vector_store %arg9[%c0_56, %c0_57, %c0_58], %148 {strides = array<i32>} : memref<1x8x64xf32, #tpu.memory_space<vmem>>, vector<1x8x64xf32>,
    return
  }
  func.func @transform_0(%arg0: i32) -> (i32, i32, i32) {
    %c0_i32 = arith.constant 0 : i32
    %c0_i32_0 = arith.constant 0 : i32
    %c0_i32_1 = arith.constant 0 : i32
    return %arg0, %c0_i32, %c0_i32_0 : i32, i32, i32
  }
  func.func @transform_1(%arg0: i32) -> (i32, i32) {
    %c0_i32 = arith.constant 0 : i32
    %c0_i32_0 = arith.constant 0 : i32
    %c0_i32_1 = arith.constant 0 : i32
    return %c0_i32, %c0_i32_0 : i32, i32
  }
  func.func @transform_2(%arg0: i32) -> (i32, i32) {
    %c0_i32 = arith.constant 0 : i32
    %c0_i32_0 = arith.constant 0 : i32
    %c0_i32_1 = arith.constant 0 : i32
    return %c0_i32, %c0_i32_0 : i32, i32
  }
  func.func @transform_3(%arg0: i32) -> (i32, i32) {
    %c0_i32 = arith.constant 0 : i32
    %c0_i32_0 = arith.constant 0 : i32
    %c0_i32_1 = arith.constant 0 : i32
    return %c0_i32, %c0_i32_0 : i32, i32
  }
  func.func @transform_4(%arg0: i32) -> (i32, i32) {
    %c0_i32 = arith.constant 0 : i32
    %c0_i32_0 = arith.constant 0 : i32
    %c0_i32_1 = arith.constant 0 : i32
    return %c0_i32, %c0_i32_0 : i32, i32
  }
  func.func @transform_5(%arg0: i32) -> (i32, i32) {
    %c0_i32 = arith.constant 0 : i32
    %c0_i32_0 = arith.constant 0 : i32
    %c0_i32_1 = arith.constant 0 : i32
    return %c0_i32, %c0_i32_0 : i32, i32
  }
  func.func @transform_6(%arg0: i32) -> (i32, i32) {
    %c0_i32 = arith.constant 0 : i32
    %c0_i32_0 = arith.constant 0 : i32
    %c0_i32_1 = arith.constant 0 : i32
    return %c0_i32, %c0_i32_0 : i32, i32
  }
  func.func @transform_7(%arg0: i32) -> (i32, i32) {
    %c0_i32 = arith.constant 0 : i32
    %c0_i32_0 = arith.constant 0 : i32
    %c0_i32_1 = arith.constant 0 : i32
    return %c0_i32, %c0_i32_0 : i32, i32
  }
  func.func @transform_8(%arg0: i32) -> (i32, i32, i32) {
    %c0_i32 = arith.constant 0 : i32
    %c0_i32_0 = arith.constant 0 : i32
    %c0_i32_1 = arith.constant 0 : i32
    return %arg0, %c0_i32, %c0_i32_0 : i32, i32, i32
  }
  func.func @transform_9(%arg0: i32) -> (i32, i32, i32) {
    %c0_i32 = arith.constant 0 : i32
    %c0_i32_0 = arith.constant 0 : i32
    %c0_i32_1 = arith.constant 0 : i32
    return %arg0, %c0_i32, %c0_i32_0 : i32, i32, i32
  }
}

</mosaic_0001>

<llo_original>
// kernel: attention_module.1
$region0: #{attention_module.1}
  #allocation0 [shape = 'u32[]', space=smem, size = 0x4, offset = 0x4, fixed_abs, tag = 'smem constant byte address 0x4 - core index']
  #allocation1 [shape = 'u32[144,128]{1,0:T(1,128)}', space=vmem, size = 0x12000, scoped, tag = 'internal scratch']
  %s0 = inlined_call_operand.vmem [shape: f32[2,8,64], index: 0, kind: input, shape index: {}]
  %s1 = inlined_call_operand.vmem [shape: bf16[64,14], index: 1, kind: input, shape index: {}]
  %s2 = inlined_call_operand.vmem [shape: f32[14,64], index: 2, kind: input, shape index: {}]
  %s3 = inlined_call_operand.vmem [shape: bf16[7,112], index: 3, kind: input, shape index: {}]
  %s4 = inlined_call_operand.vmem [shape: bf16[8,7], index: 4, kind: input, shape index: {}]
  %s5 = inlined_call_operand.vmem [shape: f32[8,1], index: 5, kind: input, shape index: {}]
  %s6 = inlined_call_operand.vmem [shape: bf16[128,64], index: 6, kind: input, shape index: {}]
  %s7 = inlined_call_operand.vmem [shape: f32[1,64], index: 7, kind: input, shape index: {}]
  %s8 = inlined_call_operand.vmem [shape: f32[2,8,64], index: 8, kind: output, shape index: {0}]
  %s9 = inlined_call_operand.vmem [shape: f32[2,8,64], index: 9, kind: output, shape index: {1}]
  %10 = xla_tuple %s8, %s9
  %s11 = sld [smem:[#allocation0]]
  $region73: #{attention_module.1} parent=0
    _
  %s13 = ssub.s32 1, %s11
  %s14 = scalar_select 0, %s13, %s11
  loop: start=0, step=1, limit=4
  $region2: #{attention_module.1} parent=0 // loop_pre_header
    _
  $region3: #{attention_module.1} parent=0 // loop_header
    %s16 = sphi 0, %s20
    %p17 = scmp.ge.s32.totalorder %s16, 4
    %s26 = sphi 0, %s28
    %s29 = sphi 0, %s26
    %s30 = sphi 0, %s29
    %s46 = sphi 0, %s30
    %s50 = sphi 0, %s50
    %s52 = sphi 0, %s50
    %s53 = sphi 0, %s52
    %s67 = sphi 0, %s53
    %s71 = sphi 0, %s71
    %s73 = sphi 0, %s71
    %s74 = sphi 0, %s73
    %s88 = sphi 0, %s74
    %s92 = sphi 0, %s92
    %s94 = sphi 0, %s92
    %s95 = sphi 0, %s94
    %s109 = sphi 0, %s95
    %s113 = sphi 0, %s113
    %s115 = sphi 0, %s113
    %s116 = sphi 0, %s115
    %s130 = sphi 0, %s116
    %s134 = sphi 0, %s134
    %s136 = sphi 0, %s134
    %s137 = sphi 0, %s136
    %s151 = sphi 0, %s137
    %s155 = sphi 0, %s155
    %s157 = sphi 0, %s155
    %s158 = sphi 0, %s157
    %s172 = sphi 0, %s158
    %s176 = sphi 0, %s176
    %s178 = sphi 0, %s176
    %s179 = sphi 0, %s178
    %s193 = sphi 0, %s179
    %s199 = sphi 0, %s201
    %s202 = sphi 0, %s199
    %s203 = sphi 0, %s202
    %s219 = sphi 0, %s203
    %s225 = sphi 0, %s227
    %s228 = sphi 0, %s225
    %s229 = sphi 0, %s228
    %s245 = sphi 0, %s229
  $region4: #{attention_module.1} parent=0 // loop_header_branch
    %19 = sbr.rel (%p17) target = $region8
  $region5: #{attention_module.1} parent=0 // loop_body
    %s21 = ssub.s32 %s16, 1
    %s22 = ssub.s32 %s16, 2
    %s23 = sadd.s32 %s16, 1
    %s24 = ssub.s32 %s16, %s23
    %p25 = scmp.eq.s32.totalorder %s24, 0
    %s27 = sadd.s32 %s26, 1
    %s28 = scalar_select %p25, %s26, %s27
    %p31 = pneg %p25
    %p32 = scmp.eq.s32.totalorder %s16, 1
    %p33 = por %p31, %p32
    %p34 = scmp.ne.s32.totalorder %s26, %s29
    %p35 = scmp.eq.s32.totalorder %s16, 0
    %p36 = por %p34, %p35
    %p37 = scmp.ne.s32.totalorder %s26, %s29
    %p38 = scmp.eq.s32.totalorder %s21, 1
    %p39 = por %p37, %p38
    %p40 = scmp.ne.s32.totalorder %s29, %s30
    %p41 = scmp.eq.s32.totalorder %s21, 0
    %p42 = por %p40, %p41
    %p43 = scmp.ne.s32.totalorder %s29, %s30
    %p44 = scmp.eq.s32.totalorder %s22, 1
    %p45 = por %p43, %p44
    %p47 = scmp.ne.s32.totalorder %s30, %s46
    %p48 = scmp.eq.s32.totalorder %s22, 0
    %p49 = por %p47, %p48
    %s51 = sadd.s32 %s50, 1
    %p54 = scmp.eq.s32.totalorder %s16, 1
    %p55 = scmp.ne.s32.totalorder %s50, %s52
    %p56 = scmp.eq.s32.totalorder %s16, 0
    %p57 = por %p55, %p56
    %p58 = scmp.ne.s32.totalorder %s50, %s52
    %p59 = scmp.eq.s32.totalorder %s21, 1
    %p60 = por %p58, %p59
    %p61 = scmp.ne.s32.totalorder %s52, %s53
    %p62 = scmp.eq.s32.totalorder %s21, 0
    %p63 = por %p61, %p62
    %p64 = scmp.ne.s32.totalorder %s52, %s53
    %p65 = scmp.eq.s32.totalorder %s22, 1
    %p66 = por %p64, %p65
    %p68 = scmp.ne.s32.totalorder %s53, %s67
    %p69 = scmp.eq.s32.totalorder %s22, 0
    %p70 = por %p68, %p69
    %s72 = sadd.s32 %s71, 1
    %p75 = scmp.eq.s32.totalorder %s16, 1
    %p76 = scmp.ne.s32.totalorder %s71, %s73
    %p77 = scmp.eq.s32.totalorder %s16, 0
    %p78 = por %p76, %p77
    %p79 = scmp.ne.s32.totalorder %s71, %s73
    %p80 = scmp.eq.s32.totalorder %s21, 1
    %p81 = por %p79, %p80
    %p82 = scmp.ne.s32.totalorder %s73, %s74
    %p83 = scmp.eq.s32.totalorder %s21, 0
    %p84 = por %p82, %p83
    %p85 = scmp.ne.s32.totalorder %s73, %s74
    %p86 = scmp.eq.s32.totalorder %s22, 1
    %p87 = por %p85, %p86
    %p89 = scmp.ne.s32.totalorder %s74, %s88
    %p90 = scmp.eq.s32.totalorder %s22, 0
    %p91 = por %p89, %p90
    %s93 = sadd.s32 %s92, 1
    %p96 = scmp.eq.s32.totalorder %s16, 1
    %p97 = scmp.ne.s32.totalorder %s92, %s94
    %p98 = scmp.eq.s32.totalorder %s16, 0
    %p99 = por %p97, %p98
    %p100 = scmp.ne.s32.totalorder %s92, %s94
    %p101 = scmp.eq.s32.totalorder %s21, 1
    %p102 = por %p100, %p101
    %p103 = scmp.ne.s32.totalorder %s94, %s95
    %p104 = scmp.eq.s32.totalorder %s21, 0
    %p105 = por %p103, %p104
    %p106 = scmp.ne.s32.totalorder %s94, %s95
    %p107 = scmp.eq.s32.totalorder %s22, 1
    %p108 = por %p106, %p107
    %p110 = scmp.ne.s32.totalorder %s95, %s109
    %p111 = scmp.eq.s32.totalorder %s22, 0
    %p112 = por %p110, %p111
    %s114 = sadd.s32 %s113, 1
    %p117 = scmp.eq.s32.totalorder %s16, 1
    %p118 = scmp.ne.s32.totalorder %s113, %s115
    %p119 = scmp.eq.s32.totalorder %s16, 0
    %p120 = por %p118, %p119
    %p121 = scmp.ne.s32.totalorder %s113, %s115
    %p122 = scmp.eq.s32.totalorder %s21, 1
    %p123 = por %p121, %p122
    %p124 = scmp.ne.s32.totalorder %s115, %s116
    %p125 = scmp.eq.s32.totalorder %s21, 0
    %p126 = por %p124, %p125
    %p127 = scmp.ne.s32.totalorder %s115, %s116
    %p128 = scmp.eq.s32.totalorder %s22, 1
    %p129 = por %p127, %p128
    %p131 = scmp.ne.s32.totalorder %s116, %s130
    %p132 = scmp.eq.s32.totalorder %s22, 0
    %p133 = por %p131, %p132
    %s135 = sadd.s32 %s134, 1
    %p138 = scmp.eq.s32.totalorder %s16, 1
    %p139 = scmp.ne.s32.totalorder %s134, %s136
    %p140 = scmp.eq.s32.totalorder %s16, 0
    %p141 = por %p139, %p140
    %p142 = scmp.ne.s32.totalorder %s134, %s136
    %p143 = scmp.eq.s32.totalorder %s21, 1
    %p144 = por %p142, %p143
    %p145 = scmp.ne.s32.totalorder %s136, %s137
    %p146 = scmp.eq.s32.totalorder %s21, 0
    %p147 = por %p145, %p146
    %p148 = scmp.ne.s32.totalorder %s136, %s137
    %p149 = scmp.eq.s32.totalorder %s22, 1
    %p150 = por %p148, %p149
    %p152 = scmp.ne.s32.totalorder %s137, %s151
    %p153 = scmp.eq.s32.totalorder %s22, 0
    %p154 = por %p152, %p153
    %s156 = sadd.s32 %s155, 1
    %p159 = scmp.eq.s32.totalorder %s16, 1
    %p160 = scmp.ne.s32.totalorder %s155, %s157
    %p161 = scmp.eq.s32.totalorder %s16, 0
    %p162 = por %p160, %p161
    %p163 = scmp.ne.s32.totalorder %s155, %s157
    %p164 = scmp.eq.s32.totalorder %s21, 1
    %p165 = por %p163, %p164
    %p166 = scmp.ne.s32.totalorder %s157, %s158
    %p167 = scmp.eq.s32.totalorder %s21, 0
    %p168 = por %p166, %p167
    %p169 = scmp.ne.s32.totalorder %s157, %s158
    %p170 = scmp.eq.s32.totalorder %s22, 1
    %p171 = por %p169, %p170
    %p173 = scmp.ne.s32.totalorder %s158, %s172
    %p174 = scmp.eq.s32.totalorder %s22, 0
    %p175 = por %p173, %p174
    %s177 = sadd.s32 %s176, 1
    %p180 = scmp.eq.s32.totalorder %s16, 1
    %p181 = scmp.ne.s32.totalorder %s176, %s178
    %p182 = scmp.eq.s32.totalorder %s16, 0
    %p183 = por %p181, %p182
    %p184 = scmp.ne.s32.totalorder %s176, %s178
    %p185 = scmp.eq.s32.totalorder %s21, 1
    %p186 = por %p184, %p185
    %p187 = scmp.ne.s32.totalorder %s178, %s179
    %p188 = scmp.eq.s32.totalorder %s21, 0
    %p189 = por %p187, %p188
    %p190 = scmp.ne.s32.totalorder %s178, %s179
    %p191 = scmp.eq.s32.totalorder %s22, 1
    %p192 = por %p190, %p191
    %p194 = scmp.ne.s32.totalorder %s179, %s193
    %p195 = scmp.eq.s32.totalorder %s22, 0
    %p196 = por %p194, %p195
    %s197 = ssub.s32 %s16, %s23
    %p198 = scmp.eq.s32.totalorder %s197, 0
    %s200 = sadd.s32 %s199, 1
    %s201 = scalar_select %p198, %s199, %s200
    %p204 = pneg %p198
    %p205 = scmp.eq.s32.totalorder %s16, 1
    %p206 = por %p204, %p205
    %p207 = scmp.ne.s32.totalorder %s199, %s202
    %p208 = scmp.eq.s32.totalorder %s16, 0
    %p209 = por %p207, %p208
    %p210 = scmp.ne.s32.totalorder %s199, %s202
    %p211 = scmp.eq.s32.totalorder %s21, 1
    %p212 = por %p210, %p211
    %p213 = scmp.ne.s32.totalorder %s202, %s203
    %p214 = scmp.eq.s32.totalorder %s21, 0
    %p215 = por %p213, %p214
    %p216 = scmp.ne.s32.totalorder %s202, %s203
    %p217 = scmp.eq.s32.totalorder %s22, 1
    %p218 = por %p216, %p217
    %p220 = scmp.ne.s32.totalorder %s203, %s219
    %p221 = scmp.eq.s32.totalorder %s22, 0
    %p222 = por %p220, %p221
    %s223 = ssub.s32 %s16, %s23
    %p224 = scmp.eq.s32.totalorder %s223, 0
    %s226 = sadd.s32 %s225, 1
    %s227 = scalar_select %p224, %s225, %s226
    %p230 = pneg %p224
    %p231 = scmp.eq.s32.totalorder %s16, 1
    %p232 = por %p230, %p231
    %p233 = scmp.ne.s32.totalorder %s225, %s228
    %p234 = scmp.eq.s32.totalorder %s16, 0
    %p235 = por %p233, %p234
    %p236 = scmp.ne.s32.totalorder %s225, %s228
    %p237 = scmp.eq.s32.totalorder %s21, 1
    %p238 = por %p236, %p237
    %p239 = scmp.ne.s32.totalorder %s228, %s229
    %p240 = scmp.eq.s32.totalorder %s21, 0
    %p241 = por %p239, %p240
    %p242 = scmp.ne.s32.totalorder %s228, %s229
    %p243 = scmp.eq.s32.totalorder %s22, 1
    %p244 = por %p242, %p243
    %p246 = scmp.ne.s32.totalorder %s229, %s245
    %p247 = scmp.eq.s32.totalorder %s22, 0
    %p248 = por %p246, %p247
    %p249 = scmp.le.s32.totalorder 1, %s16
    %p250 = scmp.lt.s32.totalorder %s16, 3
    %p251 = pnand %p249, %p250
    %p252 = pneg %p251
    // Predicated region
    $region9: #{attention_module.1} parent=5 // pred_check
      _
    $region10: #{attention_module.1} parent=5 // pred_check_branch
      %254 = sbr.rel (%p251) target = $region12
    $region11: #{attention_module.1} parent=5 // pred_region
      %s255 = ssub.s32 %s16, 1
      // Predicated region
      $region13: #{attention_module.1} parent=11 // pred_check
        %p256 = pneg %p63
      $region14: #{attention_module.1} parent=11 // pred_check_branch
        %258 = sbr.rel (%p256) target = $region16
      $region15: #{attention_module.1} parent=11 // pred_region
        _
      $region16: #{attention_module.1} parent=11 // pred_fallthru
        _
      // Predicated region
      $region17: #{attention_module.1} parent=11 // pred_check
        %p259 = pneg %p84
      $region18: #{attention_module.1} parent=11 // pred_check_branch
        %261 = sbr.rel (%p259) target = $region20
      $region19: #{attention_module.1} parent=11 // pred_region
        _
      $region20: #{attention_module.1} parent=11 // pred_fallthru
        _
      // Predicated region
      $region21: #{attention_module.1} parent=11 // pred_check
        %p262 = pneg %p105
      $region22: #{attention_module.1} parent=11 // pred_check_branch
        %264 = sbr.rel (%p262) target = $region24
      $region23: #{attention_module.1} parent=11 // pred_region
        _
      $region24: #{attention_module.1} parent=11 // pred_fallthru
        _
      // Predicated region
      $region25: #{attention_module.1} parent=11 // pred_check
        %p265 = pneg %p126
      $region26: #{attention_module.1} parent=11 // pred_check_branch
        %267 = sbr.rel (%p265) target = $region28
      $region27: #{attention_module.1} parent=11 // pred_region
        _
      $region28: #{attention_module.1} parent=11 // pred_fallthru
        _
      // Predicated region
      $region29: #{attention_module.1} parent=11 // pred_check
        %p268 = pneg %p147
      $region30: #{attention_module.1} parent=11 // pred_check_branch
        %270 = sbr.rel (%p268) target = $region32
      $region31: #{attention_module.1} parent=11 // pred_region
        _
      $region32: #{attention_module.1} parent=11 // pred_fallthru
        _
      // Predicated region
      $region33: #{attention_module.1} parent=11 // pred_check
        %p271 = pneg %p168
      $region34: #{attention_module.1} parent=11 // pred_check_branch
        %273 = sbr.rel (%p271) target = $region36
      $region35: #{attention_module.1} parent=11 // pred_region
        _
      $region36: #{attention_module.1} parent=11 // pred_fallthru
        _
      // Predicated region
      $region37: #{attention_module.1} parent=11 // pred_check
        %p274 = pneg %p189
      $region38: #{attention_module.1} parent=11 // pred_check_branch
        %276 = sbr.rel (%p274) target = $region40
      $region39: #{attention_module.1} parent=11 // pred_region
        _
      $region40: #{attention_module.1} parent=11 // pred_fallthru
        _
    $region12: #{attention_module.1} parent=5 // pred_fallthru
      _
    %p277 = scmp.lt.s32.totalorder %s16, 2
    // Predicated region
    $region41: #{attention_module.1} parent=5 // pred_check
      %p278 = pneg %p277
    $region42: #{attention_module.1} parent=5 // pred_check_branch
      %280 = sbr.rel (%p278) target = $region44
    $region43: #{attention_module.1} parent=5 // pred_region
      // Predicated region
      $region45: #{attention_module.1} parent=43 // pred_check
        %p281 = pneg %p36
      $region46: #{attention_module.1} parent=43 // pred_check_branch
        %283 = sbr.rel (%p281) target = $region48
      $region47: #{attention_module.1} parent=43 // pred_region
        %p284 = scmp.lt.s32.totalorder %s16, 1
        %s285 = scalar_select %p284, %s16, 1
        %s286 = smul.addr %s285, 8
        %s287 = scalar_lea.vmem %s0, %s286
      $region48: #{attention_module.1} parent=43 // pred_fallthru
        _
    $region44: #{attention_module.1} parent=5 // pred_fallthru
      _
    %p288 = scmp.le.s32.totalorder 1, %s16
    %p289 = scmp.lt.s32.totalorder %s16, 3
    %p290 = pnand %p288, %p289
    %p291 = pneg %p290
    // Predicated region
    $region49: #{attention_module.1} parent=5 // pred_check
      _
    $region50: #{attention_module.1} parent=5 // pred_check_branch
      %293 = sbr.rel (%p290) target = $region52
    $region51: #{attention_module.1} parent=5 // pred_region
      %s294 = ssub.s32 %s16, 1
      %p295 = scmp.lt.s32.totalorder %s21, 1
      %s296 = scalar_select %p295, %s21, 1
      %s297 = smul.addr %s296, 8
      %s298 = scalar_lea.vmem %s0, %s297
      %p299 = pneg %p42
      %p300 = pneg %p39
      %p301 = pneg %p63
      %p302 = pneg %p60
      %p303 = pneg %p84
      %p304 = pneg %p81
      %p305 = pneg %p105
      %p306 = pneg %p102
      %p307 = pneg %p126
      %p308 = pneg %p123
      %p309 = pneg %p147
      %p310 = pneg %p144
      %p311 = pneg %p168
      %p312 = pneg %p165
      %p313 = pneg %p189
      %p314 = pneg %p186
      %p315 = pneg %p215
      %p316 = pneg %p212
      %p317 = scmp.lt.s32.totalorder %s21, 1
      %s318 = scalar_select %p317, %s21, 1
      %s319 = smul.addr %s318, 8
      %s320 = scalar_lea.vmem %s8, %s319
      %p321 = pneg %p241
      %p322 = pneg %p238
      %p323 = scmp.lt.s32.totalorder %s21, 1
      %s324 = scalar_select %p323, %s21, 1
      %s325 = smul.addr %s324, 8
      %s326 = scalar_lea.vmem %s9, %s325
      %p327 = scmp.lt.s32.totalorder %s21, 1
      %s328 = scalar_select %p327, %s21, 1
      %s329 = smul.addr %s328, 8
      %s330 = scalar_lea.vmem %s0, %s329
      %p331 = scmp.lt.s32.totalorder %s21, 1
      %s332 = scalar_select %p331, %s21, 1
      %s333 = smul.addr %s332, 8
      %s334 = scalar_lea.vmem %s8, %s333
      %p335 = scmp.lt.s32.totalorder %s21, 1
      %s336 = scalar_select %p335, %s21, 1
      %s337 = smul.addr %s336, 8
      %s338 = scalar_lea.vmem %s9, %s337
      %v340 = vld [vmem:[%s330] sm:$0xff]
      %v341 = vpack.c.bf16 %v340, %v340
      %v342 = vld [vmem:[%s1] sm:$0xf]
      %v343 = vld [vmem:[%s1 + $0x4] sm:$0xf]
      %v344 = vld [vmem:[%s1 + $0x8] sm:$0xf]
      %v345 = vld [vmem:[%s1 + $0xc] sm:$0xf]
      %v346 = vld [vmem:[%s1 + $0x10] sm:$0xf]
      %v347 = vld [vmem:[%s1 + $0x14] sm:$0xf]
      %v348 = vld [vmem:[%s1 + $0x18] sm:$0xf]
      %v349 = vld [vmem:[%s1 + $0x1c] sm:$0xf]
      %v358 = vunpack.c.l.b16 %v342
      %v359 = vunpack.c.l.b16 %v343
      %v360 = vunpack.c.l.b16 %v344
      %v361 = vunpack.c.l.b16 %v345
      %v362 = vunpack.c.l.b16 %v346
      %v363 = vunpack.c.l.b16 %v347
      %v364 = vunpack.c.l.b16 %v348
      %v365 = vunpack.c.l.b16 %v349
      %v366 = vpack.c.b16 %v359, %v358
      %v367 = vpack.c.b16 %v361, %v360
      %v368 = vpack.c.b16 %v363, %v362
      %v369 = vpack.c.b16 %v365, %v364
      %vm374 = vcmask 523264
      %v376 = vsel %vm374, %v341, 0
      %378 = vmatprep.subr.bf16.mxu0 0
      %379 = vmatpush1.bf16.msra.mxu0 %v366
      %380 = vmatprep.subr.bf16.mxu0 0
      %381 = vmatpush1.bf16.msra.mxu0 %v367
      %382 = vmatprep.subr.bf16.mxu0 0
      %383 = vmatpush1.bf16.msra.mxu0 %v368
      %384 = vmatprep.subr.bf16.mxu0 0
      %385 = vmatpush1.bf16.msra.mxu0 %v369
      %386 = vmatprep.subr.bf16.mxu0 0
      %387 = vmatpush1.bf16.msra.mxu0 0
      %388 = vmatprep.subr.bf16.mxu0 0
      %389 = vmatpush1.bf16.msra.mxu0 0
      %390 = vmatprep.subr.bf16.mxu0 0
      %391 = vmatpush1.bf16.msra.mxu0 0
      %392 = vmatprep.subr.bf16.mxu0 0
      %393 = vmatpush1.bf16.msra.mxu0 0
      %394 = vmatprep.subr.bf16.mxu0 0
      %395 = vmatpush1.bf16.msra.mxu0 0
      %396 = vmatprep.subr.bf16.mxu0 0
      %397 = vmatpush1.bf16.msra.mxu0 0
      %398 = vmatprep.subr.bf16.mxu0 0
      %399 = vmatpush1.bf16.msra.mxu0 0
      %400 = vmatprep.subr.bf16.mxu0 0
      %401 = vmatpush1.bf16.msra.mxu0 0
      %402 = vmatprep.subr.bf16.mxu0 0
      %403 = vmatpush1.bf16.msra.mxu0 0
      %404 = vmatprep.subr.bf16.mxu0 0
      %405 = vmatpush1.bf16.msra.mxu0 0
      %406 = vmatprep.subr.bf16.mxu0 0
      %407 = vmatpush1.bf16.msra.mxu0 0
      %408 = vmatprep.subr.bf16.mxu0 0
      %409 = vmatpush1.bf16.msra.mxu0 0
      %410 = vmatprep.mubr.bf16.mxu0 0
      %411 = vmatmul.mubr.bf16.gmra.mrb[0].mxu0 %v376
      %v412 = vpop.f32.mrb[0].mxu0
      %v413 = vadd.f32 0.0, %v412
      %v414 = vpop.f32.mrb[0].mxu0
      %v415 = vpop.f32.mrb[0].mxu0
      %v416 = vpop.f32.mrb[0].mxu0
      %417 = vdwg.mxu0
      %v418 = vld [vmem:[%s2] sm:$0x1]
      %v419 = vlaneseq
      %v420 = vshrl.u32 %v419, 7
      %v421 = vsub.s32 0, %v420
      %v422 = vrot.slane %v418, %v421
      %v423 = vadd.f32 %v340, %v422
      %v424 = vsel %vm374, %v423, -inf
      %425 = vmax.xlane.f32.xlu0 %v424
      %v426 = vpop.xlane.xlu0 %425
      %v427 = vadd.f32 %v413, %v426
      %v428 = vld [vmem:[%s2 + $0x1] sm:$0x1]
      %v429 = vlaneseq
      %v430 = vshrl.u32 %v429, 7
      %v431 = vsub.s32 0, %v430
      %v432 = vrot.slane %v428, %v431
      %v433 = vadd.f32 %v340, %v432
      %v434 = vsel %vm374, %v433, -inf
      %435 = vmax.xlane.f32.xlu0 %v434
      %v436 = vpop.xlane.xlu0 %435
      %v437 = vadd.f32 %v413, %v436
      %v438 = vld [vmem:[%s2 + $0x2] sm:$0x1]
      %v439 = vlaneseq
      %v440 = vshrl.u32 %v439, 7
      %v441 = vsub.s32 0, %v440
      %v442 = vrot.slane %v438, %v441
      %v443 = vadd.f32 %v340, %v442
      %v444 = vsel %vm374, %v443, -inf
      %445 = vmax.xlane.f32.xlu0 %v444
      %v446 = vpop.xlane.xlu0 %445
      %v447 = vadd.f32 %v413, %v446
      %v448 = vld [vmem:[%s2 + $0x3] sm:$0x1]
      %v449 = vlaneseq
      %v450 = vshrl.u32 %v449, 7
      %v451 = vsub.s32 0, %v450
      %v452 = vrot.slane %v448, %v451
      %v453 = vadd.f32 %v340, %v452
      %v454 = vsel %vm374, %v453, -inf
      %455 = vmax.xlane.f32.xlu0 %v454
      %v456 = vpop.xlane.xlu0 %455
      %v457 = vadd.f32 %v413, %v456
      %v458 = vld [vmem:[%s2 + $0x4] sm:$0x1]
      %v459 = vlaneseq
      %v460 = vshrl.u32 %v459, 7
      %v461 = vsub.s32 0, %v460
      %v462 = vrot.slane %v458, %v461
      %v463 = vadd.f32 %v340, %v462
      %v464 = vsel %vm374, %v463, -inf
      %465 = vmax.xlane.f32.xlu0 %v464
      %v466 = vpop.xlane.xlu0 %465
      %v467 = vadd.f32 %v413, %v466
      %v468 = vld [vmem:[%s2 + $0x5] sm:$0x1]
      %v469 = vlaneseq
      %v470 = vshrl.u32 %v469, 7
      %v471 = vsub.s32 0, %v470
      %v472 = vrot.slane %v468, %v471
      %v473 = vadd.f32 %v340, %v472
      %v474 = vsel %vm374, %v473, -inf
      %475 = vmax.xlane.f32.xlu0 %v474
      %v476 = vpop.xlane.xlu0 %475
      %v477 = vadd.f32 %v413, %v476
      %v478 = vld [vmem:[%s2 + $0x6] sm:$0x1]
      %v479 = vlaneseq
      %v480 = vshrl.u32 %v479, 7
      %v481 = vsub.s32 0, %v480
      %v482 = vrot.slane %v478, %v481
      %v483 = vadd.f32 %v340, %v482
      %v484 = vsel %vm374, %v483, -inf
      %485 = vmax.xlane.f32.xlu0 %v484
      %v486 = vpop.xlane.xlu0 %485
      %v487 = vadd.f32 %v413, %v486
      %v488 = vld [vmem:[%s2 + $0x7] sm:$0x1]
      %v489 = vlaneseq
      %v490 = vshrl.u32 %v489, 7
      %v491 = vsub.s32 0, %v490
      %v492 = vrot.slane %v488, %v491
      %v493 = vadd.f32 %v340, %v492
      %v494 = vsel %vm374, %v493, -inf
      %495 = vmax.xlane.f32.xlu0 %v494
      %v496 = vpop.xlane.xlu0 %495
      %v497 = vadd.f32 %v413, %v496
      %v498 = vld [vmem:[%s2 + $0x8] sm:$0x1]
      %v499 = vlaneseq
      %v500 = vshrl.u32 %v499, 7
      %v501 = vsub.s32 0, %v500
      %v502 = vrot.slane %v498, %v501
      %v503 = vadd.f32 %v340, %v502
      %v504 = vsel %vm374, %v503, -inf
      %505 = vmax.xlane.f32.xlu0 %v504
      %v506 = vpop.xlane.xlu0 %505
      %v507 = vadd.f32 %v413, %v506
      %v508 = vld [vmem:[%s2 + $0x9] sm:$0x1]
      %v509 = vlaneseq
      %v510 = vshrl.u32 %v509, 7
      %v511 = vsub.s32 0, %v510
      %v512 = vrot.slane %v508, %v511
      %v513 = vadd.f32 %v340, %v512
      %v514 = vsel %vm374, %v513, -inf
      %515 = vmax.xlane.f32.xlu0 %v514
      %v516 = vpop.xlane.xlu0 %515
      %v517 = vadd.f32 %v413, %v516
      %v518 = vld [vmem:[%s2 + $0xa] sm:$0x1]
      %v519 = vlaneseq
      %v520 = vshrl.u32 %v519, 7
      %v521 = vsub.s32 0, %v520
      %v522 = vrot.slane %v518, %v521
      %v523 = vadd.f32 %v340, %v522
      %v524 = vsel %vm374, %v523, -inf
      %525 = vmax.xlane.f32.xlu0 %v524
      %v526 = vpop.xlane.xlu0 %525
      %v527 = vadd.f32 %v413, %v526
      %v528 = vld [vmem:[%s2 + $0xb] sm:$0x1]
      %v529 = vlaneseq
      %v530 = vshrl.u32 %v529, 7
      %v531 = vsub.s32 0, %v530
      %v532 = vrot.slane %v528, %v531
      %v533 = vadd.f32 %v340, %v532
      %v534 = vsel %vm374, %v533, -inf
      %535 = vmax.xlane.f32.xlu0 %v534
      %v536 = vpop.xlane.xlu0 %535
      %v537 = vadd.f32 %v413, %v536
      %v538 = vld [vmem:[%s2 + $0xc] sm:$0x1]
      %v539 = vlaneseq
      %v540 = vshrl.u32 %v539, 7
      %v541 = vsub.s32 0, %v540
      %v542 = vrot.slane %v538, %v541
      %v543 = vadd.f32 %v340, %v542
      %v544 = vsel %vm374, %v543, -inf
      %545 = vmax.xlane.f32.xlu0 %v544
      %v546 = vpop.xlane.xlu0 %545
      %v547 = vadd.f32 %v413, %v546
      %v548 = vld [vmem:[%s2 + $0xd] sm:$0x1]
      %v549 = vlaneseq
      %v550 = vshrl.u32 %v549, 7
      %v551 = vsub.s32 0, %v550
      %v552 = vrot.slane %v548, %v551
      %v553 = vadd.f32 %v340, %v552
      %v554 = vsel %vm374, %v553, -inf
      %555 = vmax.xlane.f32.xlu0 %v554
      %v556 = vpop.xlane.xlu0 %555
      %v557 = vadd.f32 %v413, %v556
      %559 = vrot.lane.b32.xlu0 %v437, 127
      %v560 = vpop.permute.xlu0 %559
      %563 = vrot.lane.b32.xlu0 %v447, 126
      %v564 = vpop.permute.xlu0 %563
      %567 = vrot.lane.b32.xlu0 %v457, 125
      %v568 = vpop.permute.xlu0 %567
      %571 = vrot.lane.b32.xlu0 %v467, 124
      %v572 = vpop.permute.xlu0 %571
      %575 = vrot.lane.b32.xlu0 %v477, 123
      %v576 = vpop.permute.xlu0 %575
      %579 = vrot.lane.b32.xlu0 %v487, 122
      %v580 = vpop.permute.xlu0 %579
      %583 = vrot.lane.b32.xlu0 %v497, 121
      %v584 = vpop.permute.xlu0 %583
      %587 = vrot.lane.b32.xlu0 %v507, 120
      %v588 = vpop.permute.xlu0 %587
      %591 = vrot.lane.b32.xlu0 %v517, 119
      %v592 = vpop.permute.xlu0 %591
      %595 = vrot.lane.b32.xlu0 %v527, 118
      %v596 = vpop.permute.xlu0 %595
      %599 = vrot.lane.b32.xlu0 %v537, 117
      %v600 = vpop.permute.xlu0 %599
      %603 = vrot.lane.b32.xlu0 %v547, 116
      %v604 = vpop.permute.xlu0 %603
      %607 = vrot.lane.b32.xlu0 %v557, 115
      %v608 = vpop.permute.xlu0 %607
      %v610 = vpack.c.bf16 %v560, %v427
      %v611 = vpack.c.bf16 %v568, %v564
      %v612 = vpack.c.bf16 %v576, %v572
      %v613 = vpack.c.bf16 %v584, %v580
      %v614 = vpack.c.bf16 %v592, %v588
      %v615 = vpack.c.bf16 %v600, %v596
      %v616 = vpack.c.bf16 %v608, %v604
      %v617 = vld [vmem:[%s3] sm:$0xf]
      %vm618 = vcmask 916480
      %v620 = vsel %vm618, %v617, 0
      %622 = vmatprep.subr.bf16.mxu0 0
      %623 = vmatpush1.bf16.msra.mxu0 %v610
      %624 = vmatprep.subr.bf16.mxu0 0
      %625 = vmatpush1.bf16.msra.mxu0 %v611
      %626 = vmatprep.subr.bf16.mxu0 0
      %627 = vmatpush1.bf16.msra.mxu0 %v612
      %628 = vmatprep.subr.bf16.mxu0 0
      %629 = vmatpush1.bf16.msra.mxu0 %v613
      %630 = vmatprep.subr.bf16.mxu0 0
      %631 = vmatpush1.bf16.msra.mxu0 %v614
      %632 = vmatprep.subr.bf16.mxu0 0
      %633 = vmatpush1.bf16.msra.mxu0 %v615
      %634 = vmatprep.subr.bf16.mxu0 0
      %635 = vmatpush1.bf16.msra.mxu0 %v616
      %636 = vmatprep.subr.bf16.mxu0 0
      %637 = vmatpush1.bf16.msra.mxu0 0
      %638 = vmatprep.subr.bf16.mxu0 0
      %639 = vmatpush1.bf16.msra.mxu0 0
      %640 = vmatprep.subr.bf16.mxu0 0
      %641 = vmatpush1.bf16.msra.mxu0 0
      %642 = vmatprep.subr.bf16.mxu0 0
      %643 = vmatpush1.bf16.msra.mxu0 0
      %644 = vmatprep.subr.bf16.mxu0 0
      %645 = vmatpush1.bf16.msra.mxu0 0
      %646 = vmatprep.subr.bf16.mxu0 0
      %647 = vmatpush1.bf16.msra.mxu0 0
      %648 = vmatprep.subr.bf16.mxu0 0
      %649 = vmatpush1.bf16.msra.mxu0 0
      %650 = vmatprep.subr.bf16.mxu0 0
      %651 = vmatpush1.bf16.msra.mxu0 0
      %652 = vmatprep.subr.bf16.mxu0 0
      %653 = vmatpush1.bf16.msra.mxu0 0
      %654 = vmatprep.mubr.bf16.mxu0 0
      %655 = vmatmul.mubr.bf16.gmra.mrb[0].mxu0 %v620
      %v656 = vpop.f32.mrb[0].mxu0
      %v657 = vadd.f32 0.0, %v656
      %v658 = vpop.f32.mrb[0].mxu0
      %v659 = vpop.f32.mrb[0].mxu0
      %v660 = vpop.f32.mrb[0].mxu0
      %661 = vdwg.mxu0
      %v662 = vmax.f32 %v657, 0.0
      %v663 = vld [vmem:[%s4] sm:$0xf]
      %v664 = vpack.c.bf16 %v662, %v662
      %v665 = vld [vmem:[%s5] sm:$0xff]
      %vm666 = vcmask 56320
      %v668 = vsel %vm666, %v663, 0
      %vm670 = vcmask 1042432
      %vm671 = vcmask 1043456
      %v672 = vsel %vm670, 4294967295, 65535
      %v673 = vsel %vm671, %v672, 0
      %v675 = vand.u32 %v664, %v673
      %677 = vmatprep.subr.bf16.mxu0 0
      %678 = vmatpush1.bf16.msra.mxu0 %v675
      %679 = vmatprep.subr.bf16.mxu0 0
      %680 = vmatpush1.bf16.msra.mxu0 0
      %681 = vmatprep.subr.bf16.mxu0 0
      %682 = vmatpush1.bf16.msra.mxu0 0
      %683 = vmatprep.subr.bf16.mxu0 0
      %684 = vmatpush1.bf16.msra.mxu0 0
      %685 = vmatprep.subr.bf16.mxu0 0
      %686 = vmatpush1.bf16.msra.mxu0 0
      %687 = vmatprep.subr.bf16.mxu0 0
      %688 = vmatpush1.bf16.msra.mxu0 0
      %689 = vmatprep.subr.bf16.mxu0 0
      %690 = vmatpush1.bf16.msra.mxu0 0
      %691 = vmatprep.subr.bf16.mxu0 0
      %692 = vmatpush1.bf16.msra.mxu0 0
      %693 = vmatprep.subr.bf16.mxu0 0
      %694 = vmatpush1.bf16.msra.mxu0 0
      %695 = vmatprep.subr.bf16.mxu0 0
      %696 = vmatpush1.bf16.msra.mxu0 0
      %697 = vmatprep.subr.bf16.mxu0 0
      %698 = vmatpush1.bf16.msra.mxu0 0
      %699 = vmatprep.subr.bf16.mxu0 0
      %700 = vmatpush1.bf16.msra.mxu0 0
      %701 = vmatprep.subr.bf16.mxu0 0
      %702 = vmatpush1.bf16.msra.mxu0 0
      %703 = vmatprep.subr.bf16.mxu0 0
      %704 = vmatpush1.bf16.msra.mxu0 0
      %705 = vmatprep.subr.bf16.mxu0 0
      %706 = vmatpush1.bf16.msra.mxu0 0
      %707 = vmatprep.subr.bf16.mxu0 0
      %708 = vmatpush1.bf16.msra.mxu0 0
      %709 = vmatprep.mubr.bf16.mxu0 0
      %710 = vmatmul.mubr.bf16.gmra.mrb[0].mxu0 %v668
      %v711 = vpop.f32.mrb[0].mxu0
      %v712 = vadd.f32 %v665, %v711
      %v713 = vpop.f32.mrb[0].mxu0
      %v714 = vpop.f32.mrb[0].mxu0
      %v715 = vpop.f32.mrb[0].mxu0
      %716 = vdwg.mxu0
      %v717 = vxor.u32 %v712, 2147483648
      %v718 = vmul.f32 %v717, 1.442695
      %v719 = vpow.pop %v718
      %v720 = vadd.f32 %v719, 1.0
      %v721 = vrcp.pop %v720
      %v722 = vmul.f32 1.0, %v721
      %v723 = vsel %vm374, %v340, -inf
      %v724 = vrot.slane %v723, 4
      %v725 = vmax.f32 %v723, %v724
      %v726 = vrot.slane %v725, 2
      %v727 = vmax.f32 %v725, %v726
      %v728 = vrot.slane %v727, 1
      %v729 = vmax.f32 %v727, %v728
      %v730 = vsel %vm374, %v340, 0.0
      %v731 = vrot.slane %v730, 4
      %v732 = vadd.f32 %v730, %v731
      %v733 = vrot.slane %v732, 2
      %v734 = vadd.f32 %v732, %v733
      %v735 = vrot.slane %v734, 1
      %v736 = vadd.f32 %v734, %v735
      %v737 = vmul.f32 %v736, 0.125
      %739 = vrot.lane.b32.xlu0 %v737, 64
      %v740 = vpop.permute.xlu0 %739
      %v742 = vsel %vm374, %v729, %v740
      %v743 = vpack.c.bf16 %v742, %v742
      %v744 = vld [vmem:[%s6] sm:$0xf]
      %v745 = vld [vmem:[%s6 + $0x4] sm:$0xf]
      %v746 = vld [vmem:[%s6 + $0x8] sm:$0xf]
      %v747 = vld [vmem:[%s6 + $0xc] sm:$0xf]
      %v748 = vld [vmem:[%s6 + $0x10] sm:$0xf]
      %v749 = vld [vmem:[%s6 + $0x14] sm:$0xf]
      %v750 = vld [vmem:[%s6 + $0x18] sm:$0xf]
      %v751 = vld [vmem:[%s6 + $0x1c] sm:$0xf]
      %v752 = vld [vmem:[%s6 + $0x20] sm:$0xf]
      %v753 = vld [vmem:[%s6 + $0x24] sm:$0xf]
      %v754 = vld [vmem:[%s6 + $0x28] sm:$0xf]
      %v755 = vld [vmem:[%s6 + $0x2c] sm:$0xf]
      %v756 = vld [vmem:[%s6 + $0x30] sm:$0xf]
      %v757 = vld [vmem:[%s6 + $0x34] sm:$0xf]
      %v758 = vld [vmem:[%s6 + $0x38] sm:$0xf]
      %v759 = vld [vmem:[%s6 + $0x3c] sm:$0xf]
      %v760 = vld [vmem:[%s7] sm:$0x1]
      %v777 = vunpack.c.l.b16 %v744
      %v778 = vunpack.c.l.b16 %v745
      %v779 = vunpack.c.l.b16 %v746
      %v780 = vunpack.c.l.b16 %v747
      %v781 = vunpack.c.l.b16 %v748
      %v782 = vunpack.c.l.b16 %v749
      %v783 = vunpack.c.l.b16 %v750
      %v784 = vunpack.c.l.b16 %v751
      %v785 = vunpack.c.l.b16 %v752
      %v786 = vunpack.c.l.b16 %v753
      %v787 = vunpack.c.l.b16 %v754
      %v788 = vunpack.c.l.b16 %v755
      %v789 = vunpack.c.l.b16 %v756
      %v790 = vunpack.c.l.b16 %v757
      %v791 = vunpack.c.l.b16 %v758
      %v792 = vunpack.c.l.b16 %v759
      %v793 = vpack.c.b16 %v778, %v777
      %v794 = vpack.c.b16 %v780, %v779
      %v795 = vpack.c.b16 %v782, %v781
      %v796 = vpack.c.b16 %v784, %v783
      %v797 = vpack.c.b16 %v786, %v785
      %v798 = vpack.c.b16 %v788, %v787
      %v799 = vpack.c.b16 %v790, %v789
      %v800 = vpack.c.b16 %v792, %v791
      %809 = vmatprep.subr.bf16.mxu0 0
      %810 = vmatpush1.bf16.msra.mxu0 %v793
      %811 = vmatprep.subr.bf16.mxu0 0
      %812 = vmatpush1.bf16.msra.mxu0 %v794
      %813 = vmatprep.subr.bf16.mxu0 0
      %814 = vmatpush1.bf16.msra.mxu0 %v795
      %815 = vmatprep.subr.bf16.mxu0 0
      %816 = vmatpush1.bf16.msra.mxu0 %v796
      %817 = vmatprep.subr.bf16.mxu0 0
      %818 = vmatpush1.bf16.msra.mxu0 %v797
      %819 = vmatprep.subr.bf16.mxu0 0
      %820 = vmatpush1.bf16.msra.mxu0 %v798
      %821 = vmatprep.subr.bf16.mxu0 0
      %822 = vmatpush1.bf16.msra.mxu0 %v799
      %823 = vmatprep.subr.bf16.mxu0 0
      %824 = vmatpush1.bf16.msra.mxu0 %v800
      %825 = vmatprep.subr.bf16.mxu0 0
      %826 = vmatpush1.bf16.msra.mxu0 0
      %827 = vmatprep.subr.bf16.mxu0 0
      %828 = vmatpush1.bf16.msra.mxu0 0
      %829 = vmatprep.subr.bf16.mxu0 0
      %830 = vmatpush1.bf16.msra.mxu0 0
      %831 = vmatprep.subr.bf16.mxu0 0
      %832 = vmatpush1.bf16.msra.mxu0 0
      %833 = vmatprep.subr.bf16.mxu0 0
      %834 = vmatpush1.bf16.msra.mxu0 0
      %835 = vmatprep.subr.bf16.mxu0 0
      %836 = vmatpush1.bf16.msra.mxu0 0
      %837 = vmatprep.subr.bf16.mxu0 0
      %838 = vmatpush1.bf16.msra.mxu0 0
      %839 = vmatprep.subr.bf16.mxu0 0
      %840 = vmatpush1.bf16.msra.mxu0 0
      %841 = vmatprep.mubr.bf16.mxu0 0
      %842 = vmatmul.mubr.bf16.gmra.mrb[0].mxu0 %v743
      %v843 = vpop.f32.mrb[0].mxu0
      %v844 = vadd.f32 %v760, %v843
      %v845 = vpop.f32.mrb[0].mxu0
      %v846 = vpop.f32.mrb[0].mxu0
      %v847 = vpop.f32.mrb[0].mxu0
      %848 = vdwg.mxu0
      %v849 = vxor.u32 %v844, 2147483648
      %v850 = vmul.f32 %v849, 1.442695
      %v851 = vpow.pop %v850
      %v852 = vadd.f32 %v851, 1.0
      %v853 = vrcp.pop %v852
      %v854 = vmul.f32 1.0, %v853
      %v855 = vmul.f32 %v340, 0.5
      %857 = vset.pattern.permute.xlu0 0
      %858 = vperm.xlu0 %857, %v722
      %v859 = vpop.permute.xlu0 %858
      %v861 = vlaneseq
      %v862 = vshrl.u32 %v861, 7
      %v863 = vsub.s32 0, %v862
      %v864 = vrot.slane %v854, %v863
      %v865 = vadd.f32 %v859, %v864
      %v866 = vmul.f32 %v855, %v865
      %867 = vst.msk [vmem:[%s338] sm:$0xff] %vm374, %v866
      %v868 = vsub.f32 %v340, %v866
      %869 = vst.msk [vmem:[%s334] sm:$0xff] %vm374, %v868
      %p870 = scmp.lt.s32.totalorder %s21, 1
      %s871 = scalar_select %p870, %s21, 1
      %s872 = smul.addr %s871, 8
      %s873 = scalar_lea.vmem %s8, %s872
      %p874 = scmp.lt.s32.totalorder %s21, 1
      %s875 = scalar_select %p874, %s21, 1
      %s876 = smul.addr %s875, 8
      %s877 = scalar_lea.vmem %s9, %s876
      // Predicated region
      $region53: #{attention_module.1} parent=51 // pred_check
        %p878 = pneg %p212
      $region54: #{attention_module.1} parent=51 // pred_check_branch
        %880 = sbr.rel (%p878) target = $region56
      $region55: #{attention_module.1} parent=51 // pred_region
        _
      $region56: #{attention_module.1} parent=51 // pred_fallthru
        _
      // Predicated region
      $region57: #{attention_module.1} parent=51 // pred_check
        %p881 = pneg %p238
      $region58: #{attention_module.1} parent=51 // pred_check_branch
        %883 = sbr.rel (%p881) target = $region60
      $region59: #{attention_module.1} parent=51 // pred_region
        _
      $region60: #{attention_module.1} parent=51 // pred_fallthru
        _
    $region52: #{attention_module.1} parent=5 // pred_fallthru
      _
    %p884 = scmp.le.s32.totalorder 2, %s16
    // Predicated region
    $region61: #{attention_module.1} parent=5 // pred_check
      %p885 = pneg %p884
    $region62: #{attention_module.1} parent=5 // pred_check_branch
      %887 = sbr.rel (%p885) target = $region64
    $region63: #{attention_module.1} parent=5 // pred_region
      %s888 = ssub.s32 %s16, 2
      // Predicated region
      $region65: #{attention_module.1} parent=63 // pred_check
        %p889 = pneg %p218
      $region66: #{attention_module.1} parent=63 // pred_check_branch
        %891 = sbr.rel (%p889) target = $region68
      $region67: #{attention_module.1} parent=63 // pred_region
        %p892 = scmp.lt.s32.totalorder %s22, 1
        %s893 = scalar_select %p892, %s22, 1
        %s894 = smul.addr %s893, 8
        %s895 = scalar_lea.vmem %s8, %s894
      $region68: #{attention_module.1} parent=63 // pred_fallthru
        _
      // Predicated region
      $region69: #{attention_module.1} parent=63 // pred_check
        %p896 = pneg %p244
      $region70: #{attention_module.1} parent=63 // pred_check_branch
        %898 = sbr.rel (%p896) target = $region72
      $region71: #{attention_module.1} parent=63 // pred_region
        %p899 = scmp.lt.s32.totalorder %s22, 1
        %s900 = scalar_select %p899, %s22, 1
        %s901 = smul.addr %s900, 8
        %s902 = scalar_lea.vmem %s9, %s901
      $region72: #{attention_module.1} parent=63 // pred_fallthru
        _
    $region64: #{attention_module.1} parent=5 // pred_fallthru
      _
  $region6: #{attention_module.1} parent=0 // loop_footer
    %s20 = sadd.s32 1, %s16
  $region7: #{attention_module.1} parent=0 // loop_footer_branch
    %15 = sbr.rel target = $region3
  $region8: #{attention_module.1} parent=0 // loop_exit
    _

</llo_original>
